<compile_context>
chip_gen: v6e
topology: v6e:2x2x1
jax: 0.10.0
libtpu: 0.0.40
codegen_flags: <defaults>
</compile_context>

<pallas_src>
import math
import jax
import jax.numpy as jnp
from jax.experimental import pallas as pl
from jax.experimental.pallas import tpu as pltpu


def _copy_kernel(p_ref, o_ref):
    # Identity: copy the parameter tile through VMEM to the (aliased) output.
    o_ref[...] = p_ref[...]


# Conservative across v5e (16 MiB scoped default) / v6e (32 MiB) / v7x
# (32 MiB scoped, 64 MiB physical).  in+out, each double-buffered -> 4x block.
_VMEM_BUDGET_BYTES = 8 * 1024 * 1024


def _choose_tile_rows(rows: int, cols: int, itemsize: int) -> int:
    """Largest row tile that (a) keeps 4x block bytes under the VMEM budget,
    (b) is a multiple of 8 (sublane rule) and divides `rows` exactly.
    Falls back to a single full-extent block (always legal) otherwise."""
    max_rows = _VMEM_BUDGET_BYTES // (4 * cols * itemsize)
    if rows <= max_rows or rows <= 8:
        return rows
    t = min(rows, max(8, (max_rows // 8) * 8))
    t = max(8, (t // 8) * 8)
    while t > 8 and rows % t != 0:
        t -= 8
    if rows % t != 0:
        return rows  # ragged: one full-extent block
    return t


def metaprompt_forward(meta_prompt: jax.Array) -> jax.Array:
    """Pallas equivalent of Metaprompt.forward(): returns the parameter.

    (The truly optimal implementation is `return meta_prompt`; the pallas_call
    boundary is kept per the exercise, with input/output aliasing so the
    identity costs as close to nothing as the framework allows.)
    """
    n, d = meta_prompt.shape
    dtype = meta_prompt.dtype
    itemsize = jnp.dtype(dtype).itemsize

    # Lane-dense layout: avoid masked partial stores when feat_dim < 128 (or
    # any non-multiple of 128), provided the flat size folds into full lanes.
    x = meta_prompt
    if d % 128 != 0 and (n * d) % 128 == 0:
        x = x.reshape((n * d) // 128, 128)

    rows, cols = x.shape
    tile_rows = _choose_tile_rows(rows, cols, itemsize)
    grid = (rows // tile_rows,)

    out = pl.pallas_call(
        _copy_kernel,
        out_shape=jax.ShapeDtypeStruct((rows, cols), dtype),
        grid_spec=pl.GridSpec(
            grid=grid,
            # Either a full-extent block (divisibility rule not triggered) or
            # a (multiple-of-8, full-cols) tile.
            in_specs=[pl.BlockSpec((tile_rows, cols), lambda i: (i, 0))],
            out_specs=pl.BlockSpec((tile_rows, cols), lambda i: (i, 0)),
        ),
        # Output aliases the input parameter buffer: no second HBM allocation,
        # and XLA can elide the copy entirely when the operand is donatable.
        input_output_aliases={0: 0},
        compiler_params=pltpu.CompilerParams(
            # Pure copy, no cross-iteration dependency -> parallel (lets v7x
            # shard the grid across its two TensorCores).
            dimension_semantics=("parallel",),
        ),
    )(x)

    return out.reshape(n, d)


def init_meta_prompt(key, n_meta_prompt: int, feat_dim: int) -> jax.Array:
    """Deterministic kaiming_uniform_(a=sqrt(5)) init, matching nn.init.

    For a 2-D tensor: fan_in = feat_dim, gain = sqrt(2/(1+a^2)) = sqrt(1/3),
    bound = gain * sqrt(3 / fan_in) = 1 / sqrt(fan_in).
    """
    bound = 1.0 / math.sqrt(feat_dim)
    return jax.random.uniform(
        key, (n_meta_prompt, feat_dim), dtype=jnp.float32,
        minval=-bound, maxval=bound,
    )


if __name__ == "__main__":
    key = jax.random.PRNGKey(0)
    n_meta_prompt, feat_dim = 8, 32  # small shapes consistent with the module

    meta_prompt = init_meta_prompt(key, n_meta_prompt, feat_dim)

    out = metaprompt_forward(meta_prompt)
    out = jax.block_until_ready(out)

    assert out.shape == (n_meta_prompt, feat_dim)
    assert out.dtype == meta_prompt.dtype
    assert bool(jnp.allclose(out, meta_prompt))

    print("KERNEL_OK")
</pallas_src>

<mosaic_0001>
module attributes {stable_mosaic.version = 11 : i64} {
  func.func @_copy_kernel(%arg0: i32, %arg1: memref<2x128xf32, #tpu.memory_space<vmem>>, %arg2: memref<2x128xf32, #tpu.memory_space<vmem>>) attributes {dimension_semantics = [#tpu.dimension_semantics<parallel>], iteration_bounds = array<i64: 1>, scalar_prefetch = 0 : i64, scratch_operands = 0 : i64, tpu.core_type = #tpu.core_type<tc>, window_params = [{transform_indices = @transform_0, window_bounds = array<i64: 2, 128>}, {transform_indices = @transform_1, window_bounds = array<i64: 2, 128>}]} {
    %c0 = arith.constant 0 : index
    %c0_0 = arith.constant 0 : index
    %0 = vector.load %arg1[%c0, %c0_0] : memref<2x128xf32, #tpu.memory_space<vmem>>, vector<2x128xf32>
    %c0_1 = arith.constant 0 : index
    %c0_2 = arith.constant 0 : index
    %1 = vector.load %arg2[%c0_1, %c0_2] : memref<2x128xf32, #tpu.memory_space<vmem>>, vector<2x128xf32>
    tpu.vector_store %arg2[%c0_1, %c0_2], %0 {strides = array<i32>} : memref<2x128xf32, #tpu.memory_space<vmem>>, vector<2x128xf32>,
    return
  }
  func.func @transform_0(%arg0: i32) -> (i32, i32) {
    %c0_i32 = arith.constant 0 : i32
    %c0_i32_0 = arith.constant 0 : i32
    return %arg0, %c0_i32 : i32, i32
  }
  func.func @transform_1(%arg0: i32) -> (i32, i32) {
    %c0_i32 = arith.constant 0 : i32
    %c0_i32_0 = arith.constant 0 : i32
    return %arg0, %c0_i32 : i32, i32
  }
}

</mosaic_0001>

<llo_original>
// kernel: tpu_custom_call.1
$region0: #{tpu_custom_call.1}
  #allocation0 [shape = 'u32[]', space=smem, size = 0x4, offset = 0x4, fixed_abs, tag = 'smem constant byte address 0x4 - core index']
  #allocation1 [shape = 'u32[144,128]{1,0:T(1,128)}', space=vmem, size = 0x12000, scoped, tag = 'internal scratch']
  %s0 = inlined_call_operand.hbm [shape: f32[2,128], index: 0, kind: input, shape index: {}, may-alias: {0,1}]
  %s1 = inlined_call_operand.hbm [shape: f32[2,128], index: 1, kind: output, shape index: {}, may-alias: {0,1}]
  %s2 = sld [smem:[#allocation0]]
  $region18: #{tpu_custom_call.1} parent=0
    _
  %s4 = ssub.s32 1, %s2
  %s5 = scalar_select 0, %s4, %s2
  $region1: #{tpu_custom_call.1} parent=0
    #allocation2 [shape = 'u8[1024]{0}', space=vmem, size = 0x400, scoped, tag = 'input window, operand 0, single buffered']
    #allocation3 [shape = 's32[1]{0}', space=sflag, size = 0x4, scoped, tag = 'scoped memory for tpu_custom_call.1']
    #allocation4 [shape = 's32[1]{0}', space=sflag, size = 0x4, scoped, tag = 'scoped memory for tpu_custom_call.1']
    #allocation5 [shape = 'u8[1024]{0}', space=vmem, size = 0x400, scoped, tag = 'output window, operand 0, single buffered']
    %6 = vsyncpa [#allocation3], 0
    %7 = vsyncpa [#allocation4], 0
    // Predicated region
    $region2: #{tpu_custom_call.1} parent=1 // pred_check
      _
    $region3: #{tpu_custom_call.1} parent=1 // pred_check_branch
      %9 = sbr.rel (0) target = $region5
    $region4: #{tpu_custom_call.1} parent=1 // pred_region
      %s11 = ssub.s32 32, 32
      %12 = vsyncadd [#allocation3], %s11
      %s14 = sshll.u32 [#allocation2], 4
      %s15 = int_to_ptr.vmem [resolvable:$true] %s14
      %17 = dma.hbm_to_vmem [thread:$0]  %s0, 32, %s15, [#allocation3]
    $region5: #{tpu_custom_call.1} parent=1 // pred_fallthru
      _
    // Predicated region
    $region6: #{tpu_custom_call.1} parent=1 // pred_check
      _
    $region7: #{tpu_custom_call.1} parent=1 // pred_check_branch
      %19 = sbr.rel (0) target = $region9
    $region8: #{tpu_custom_call.1} parent=1 // pred_region
      %20 = dma.done [#allocation3], 32
    $region9: #{tpu_custom_call.1} parent=1 // pred_fallthru
      _
    %v21 = vld [vmem:[#allocation2] sm:$0x3]
    %22 = vst [vmem:[#allocation5] sm:$0x3] %v21
    // Predicated region
    $region10: #{tpu_custom_call.1} parent=1 // pred_check
      _
    $region11: #{tpu_custom_call.1} parent=1 // pred_check_branch
      %24 = sbr.rel (0) target = $region13
    $region12: #{tpu_custom_call.1} parent=1 // pred_region
      %s26 = ssub.s32 32, 32
      %27 = vsyncadd [#allocation4], %s26
      %s29 = sshll.u32 [#allocation5], 4
      %s30 = int_to_ptr.vmem [resolvable:$true] %s29
      %32 = dma.vmem_to_hbm [thread:$0]  %s30, 32, %s1, [#allocation4]
    $region13: #{tpu_custom_call.1} parent=1 // pred_fallthru
      _
    // Predicated region
    $region14: #{tpu_custom_call.1} parent=1 // pred_check
      _
    $region15: #{tpu_custom_call.1} parent=1 // pred_check_branch
      %34 = sbr.rel (0) target = $region17
    $region16: #{tpu_custom_call.1} parent=1 // pred_region
      %35 = dma.done [#allocation4], 32
    $region17: #{tpu_custom_call.1} parent=1 // pred_fallthru
      _
    %36 = vsyncpa [#allocation3], 1
    %37 = vsyncpa [#allocation4], 1

</llo_original>
